<compile_context>
chip_gen: v7x
topology: tpu7x:2x2x1
jax: 0.10.0
libtpu: 0.0.40
codegen_flags: <defaults>
</compile_context>

<pallas_src>
import functools

import jax
import jax.numpy as jnp
from jax.experimental import pallas as pl
from jax.experimental.pallas import tpu as pltpu


def _folded_kernel(x_ref, w_ref, b_ref, o_ref, *, num_class):
    # Single fused affine map: (tb, dim) @ (dim, c_pad) + (1, c_pad).
    # Padded class columns carry a -1e30 bias, so no explicit mask is needed.
    logits = jnp.dot(x_ref[...], w_ref[...],
                     preferred_element_type=jnp.float32) + b_ref[...]
    # Numerically stable softmax over the (lane) class axis.
    m = jnp.max(logits, axis=1, keepdims=True)
    e = jnp.exp(logits - m)                  # padded columns: exp(-1e30 - m) == 0
    s = jnp.sum(e, axis=1, keepdims=True)
    inv = 1.0 / s                            # exact reciprocal on a (tb, 1) column
    # Store only the real class columns; the HBM writeback stays narrow.
    o_ref[...] = (e[:, :num_class] * inv).astype(o_ref.dtype)


def fold_and_pad_params(w0, b0, w1, b1, w2, b2):
    """Fold the activation-free 3-layer stack into one affine map (done ONCE at init).

    Returns (w_pad, b_pad, num_class) with the class axis padded to a multiple of 128
    lanes; padded W columns are 0 and padded bias columns are -1e30 (baked-in mask).
    """
    num_class = w2.shape[1]
    # Right-associative fold: cheapest when num_class << hidden dims.
    w = w0 @ (w1 @ w2)                        # (dim, num_class)
    b = (b0 @ w1 + b1) @ w2 + b2              # (1, num_class)

    c_pad = max(128, pl.cdiv(num_class, 128) * 128)
    pad = c_pad - num_class
    if pad:
        w = jnp.pad(w, ((0, 0), (0, pad)))                              # zeros
        b = jnp.pad(b, ((0, 0), (0, pad)), constant_values=-1e30)       # mask in bias
    return w, b, num_class


def _choose_batch_tile(batch):
    # Small/medium batch: one full-extent block (exempt from the 8-row rule).
    if batch <= 512:
        return batch
    # Large batch: big tiles for HBM bandwidth, but >= 2 grid steps so the batch
    # axis can split across the two TensorCores on v7x.
    half = pl.cdiv(batch, 2)
    return min(1024, pl.cdiv(half, 8) * 8)


@functools.partial(jax.jit, static_argnames=("num_class",))
def tabulated_linear_forward(x, w_pad, b_pad, num_class):
    batch, dim = x.shape
    c_pad = w_pad.shape[1]

    tb = _choose_batch_tile(batch)
    grid = (pl.cdiv(batch, tb),)

    kernel = functools.partial(_folded_kernel, num_class=num_class)
    cost = pl.CostEstimate(
        flops=2 * batch * dim * c_pad + 6 * batch * c_pad,
        transcendentals=batch * c_pad,
        bytes_accessed=4 * (batch * dim + dim * c_pad + c_pad + batch * num_class),
    )

    return pl.pallas_call(
        kernel,
        out_shape=jax.ShapeDtypeStruct((batch, num_class), jnp.float32),
        grid=grid,
        in_specs=[
            pl.BlockSpec((tb, dim), lambda i: (i, 0)),      # x tile, streamed per step
            pl.BlockSpec((dim, c_pad), lambda i: (0, 0)),   # folded W, VMEM-resident
            pl.BlockSpec((1, c_pad), lambda i: (0, 0)),     # folded b, VMEM-resident
        ],
        out_specs=pl.BlockSpec((tb, num_class), lambda i: (i, 0)),
        compiler_params=pltpu.CompilerParams(
            dimension_semantics=("parallel",)),
        cost_estimate=cost,
    )(x, w_pad, b_pad)


def init_linear_params(key, in_features, out_features):
    # Deterministic init, PyTorch-Linear-style uniform(-1/sqrt(in), 1/sqrt(in)).
    kw, kb = jax.random.split(key)
    bound = 1.0 / jnp.sqrt(jnp.float32(in_features))
    # Stored as (in, out): transpose of PyTorch's (out, in) weight layout.
    w = jax.random.uniform(kw, (in_features, out_features),
                           dtype=jnp.float32, minval=-bound, maxval=bound)
    b = jax.random.uniform(kb, (1, out_features),
                           dtype=jnp.float32, minval=-bound, maxval=bound)
    return w, b


if __name__ == "__main__":
    batch = 8
    dim = 32
    num_class = 8

    key = jax.random.PRNGKey(0)
    kx, k0, k1, k2 = jax.random.split(key, 4)

    x = jax.random.normal(kx, (batch, dim), dtype=jnp.float32)
    w0, b0 = init_linear_params(k0, dim, 512)
    w1, b1 = init_linear_params(k1, 512, 256)
    w2, b2 = init_linear_params(k2, 256, num_class)

    # Fold + pad once at "init"; the per-call path only touches ~16 KiB of weights.
    w_pad, b_pad, nc = fold_and_pad_params(w0, b0, w1, b1, w2, b2)
    w_pad = jax.block_until_ready(w_pad)
    b_pad = jax.block_until_ready(b_pad)

    out = tabulated_linear_forward(x, w_pad, b_pad, nc)
    out = jax.block_until_ready(out)

    # Reference: the unfused 3-layer forward + softmax (matches the PyTorch module).
    ref = jax.nn.softmax(((x @ w0 + b0) @ w1 + b1) @ w2 + b2, axis=1)

    assert out.shape == (batch, num_class)
    assert jnp.allclose(out, ref, atol=2e-3, rtol=2e-3)
    assert jnp.allclose(jnp.sum(out, axis=1), 1.0, atol=2e-3)

    print("KERNEL_OK")
</pallas_src>

<mosaic_0001>
module attributes {stable_mosaic.version = 11 : i64} {
  func.func @_folded_kernel(%arg0: i32, %arg1: memref<8x32xf32, #tpu.memory_space<vmem>>, %arg2: memref<32x128xf32, #tpu.memory_space<vmem>>, %arg3: memref<1x128xf32, #tpu.memory_space<vmem>>, %arg4: memref<8x8xf32, #tpu.memory_space<vmem>>) attributes {dimension_semantics = [#tpu.dimension_semantics<parallel>], iteration_bounds = array<i64: 1>, scalar_prefetch = 0 : i64, scratch_operands = 0 : i64, tpu.core_type = #tpu.core_type<tc>, window_params = [{transform_indices = @transform_0, window_bounds = array<i64: 8, 32>}, {pipeline_mode = #tpu.pipeline_mode<synchronous>, transform_indices = @transform_1, window_bounds = array<i64: 32, 128>}, {pipeline_mode = #tpu.pipeline_mode<synchronous>, transform_indices = @transform_2, window_bounds = array<i64: 1, 128>}, {transform_indices = @transform_3, window_bounds = array<i64: 8, 8>}]} {
    %c0 = arith.constant 0 : index
    %c0_0 = arith.constant 0 : index
    %0 = vector.load %arg1[%c0, %c0_0] : memref<8x32xf32, #tpu.memory_space<vmem>>, vector<8x32xf32>
    %c0_1 = arith.constant 0 : index
    %c0_2 = arith.constant 0 : index
    %1 = vector.load %arg2[%c0_1, %c0_2] : memref<32x128xf32, #tpu.memory_space<vmem>>, vector<32x128xf32>
    %cst = arith.constant dense<0.000000e+00> : vector<8x128xf32>
    %2 = tpu.matmul %0, %1, %cst {dimension_numbers = #tpu.dot_dimension_numbers<[1], [0], [0], [1], [0, 0, 1, 1], [], []>} : vector<8x32xf32>, vector<32x128xf32>, vector<8x128xf32> -> vector<8x128xf32>
    %c0_3 = arith.constant 0 : index
    %c0_4 = arith.constant 0 : index
    %3 = vector.load %arg3[%c0_3, %c0_4] : memref<1x128xf32, #tpu.memory_space<vmem>>, vector<1x128xf32>
    %4 = vector.broadcast %3 : vector<1x128xf32> to vector<8x128xf32>
    %5 = arith.addf %2, %4 : vector<8x128xf32>
    %cst_5 = arith.constant dense<0xFF800000> : vector<8xf32>
    %6 = vector.multi_reduction <maximumf>, %5, %cst_5 [1] : vector<8x128xf32> to vector<8xf32>
    %7 = vector.shape_cast %6 : vector<8xf32> to vector<8x1xf32>
    %8 = vector.broadcast %7 : vector<8x1xf32> to vector<8x128xf32>
    %9 = arith.subf %5, %8 : vector<8x128xf32>
    %10 = math.exp %9 : vector<8x128xf32>
    %cst_6 = arith.constant dense<0.000000e+00> : vector<8xf32>
    %11 = vector.multi_reduction <add>, %10, %cst_6 [1] : vector<8x128xf32> to vector<8xf32>
    %12 = vector.shape_cast %11 : vector<8xf32> to vector<8x1xf32>
    %cst_7 = arith.constant 1.000000e+00 : f32
    %13 = vector.broadcast %cst_7 : f32 to vector<8x1xf32>
    %14 = arith.divf %13, %12 : vector<8x1xf32>
    %15 = vector.extract_strided_slice %10 {offsets = [0, 0], sizes = [8, 8], strides = [1, 1]} : vector<8x128xf32> to vector<8x8xf32>
    %16 = vector.broadcast %14 : vector<8x1xf32> to vector<8x8xf32>
    %17 = arith.mulf %15, %16 : vector<8x8xf32>
    %c0_8 = arith.constant 0 : index
    %c0_9 = arith.constant 0 : index
    %18 = vector.load %arg4[%c0_8, %c0_9] : memref<8x8xf32, #tpu.memory_space<vmem>>, vector<8x8xf32>
    tpu.vector_store %arg4[%c0_8, %c0_9], %17 {strides = array<i32>} : memref<8x8xf32, #tpu.memory_space<vmem>>, vector<8x8xf32>,
    return
  }
  func.func @transform_0(%arg0: i32) -> (i32, i32) {
    %c0_i32 = arith.constant 0 : i32
    %c0_i32_0 = arith.constant 0 : i32
    return %arg0, %c0_i32 : i32, i32
  }
  func.func @transform_1(%arg0: i32) -> (i32, i32) {
    %c0_i32 = arith.constant 0 : i32
    %c0_i32_0 = arith.constant 0 : i32
    %c0_i32_1 = arith.constant 0 : i32
    return %c0_i32, %c0_i32_0 : i32, i32
  }
  func.func @transform_2(%arg0: i32) -> (i32, i32) {
    %c0_i32 = arith.constant 0 : i32
    %c0_i32_0 = arith.constant 0 : i32
    %c0_i32_1 = arith.constant 0 : i32
    return %c0_i32, %c0_i32_0 : i32, i32
  }
  func.func @transform_3(%arg0: i32) -> (i32, i32) {
    %c0_i32 = arith.constant 0 : i32
    %c0_i32_0 = arith.constant 0 : i32
    return %arg0, %c0_i32 : i32, i32
  }
}

</mosaic_0001>

<llo_original>
// kernel: tabulated_linear_forward.1
$region0: #{tabulated_linear_forward.1}
  #allocation0 [shape = 'u32[]', space=smem, size = 0x4, offset = 0x4, fixed_abs, tag = 'smem constant byte address 0x4 - core index']
  #allocation1 [shape = 'u32[144,128]{1,0:T(1,128)}', space=vmem, size = 0x12000, scoped, tag = 'internal scratch']
  %s0 = inlined_call_operand.hbm [shape: f32[8,32], index: 0, kind: input, shape index: {}]
  %s1 = inlined_call_operand.hbm [shape: f32[32,128], index: 1, kind: input, shape index: {}]
  %s2 = inlined_call_operand.vmem [shape: f32[1,128], index: 2, kind: input, shape index: {}]
  %s3 = inlined_call_operand.hbm [shape: f32[8,8], index: 3, kind: output, shape index: {}]
  %s4 = sld [smem:[#allocation0]]
  $region30: #{tabulated_linear_forward.1} parent=0
    _
  %s6 = ssub.s32 1, %s4
  %s7 = scalar_select 0, %s6, %s4
  $region1: #{tabulated_linear_forward.1} parent=0
    #allocation2 [shape = 'u8[4096]{0}', space=vmem, size = 0x1000, scoped, tag = 'input window, operand 0, single buffered']
    #allocation3 [shape = 's32[1]{0}', space=sflag, size = 0x4, scoped, tag = 'scoped memory for tabulated_linear_forward.1']
    #allocation4 [shape = 's32[1]{0}', space=sflag, size = 0x4, scoped, tag = 'scoped memory for tabulated_linear_forward.1']
    #allocation5 [shape = 'u8[16384]{0}', space=vmem, size = 0x4000, scoped, tag = 'input window, operand 1, single buffered']
    #allocation6 [shape = 's32[1]{0}', space=sflag, size = 0x4, scoped, tag = 'scoped memory for tabulated_linear_forward.1']
    #allocation7 [shape = 'u8[4096]{0}', space=vmem, size = 0x1000, scoped, tag = 'output window, operand 0, single buffered']
    %8 = vsyncpa [#allocation3], 0
    %9 = vsyncpa [#allocation6], 0
    %10 = vsyncpa [#allocation4], 0
    // Predicated region
    $region2: #{tabulated_linear_forward.1} parent=1 // pred_check
      _
    $region3: #{tabulated_linear_forward.1} parent=1 // pred_check_branch
      %12 = sbr.rel (0) target = $region5
    $region4: #{tabulated_linear_forward.1} parent=1 // pred_region
      %s14 = ssub.s32 128, 128
      %15 = vsyncadd [#allocation3], %s14
      %s17 = sshll.u32 [#allocation2], 4
      %s18 = int_to_ptr.vmem [resolvable:$true] %s17
      %20 = dma.hbm_to_vmem [thread:$0]  %s0, 128, %s18, [#allocation3]
    $region5: #{tabulated_linear_forward.1} parent=1 // pred_fallthru
      _
    // Predicated region
    $region6: #{tabulated_linear_forward.1} parent=1 // pred_check
      _
    $region7: #{tabulated_linear_forward.1} parent=1 // pred_check_branch
      %22 = sbr.rel (0) target = $region9
    $region8: #{tabulated_linear_forward.1} parent=1 // pred_region
      %s24 = ssub.s32 512, 512
      %25 = vsyncadd [#allocation6], %s24
      %s26 = sshll.u32 [#allocation5], 4
      %s27 = int_to_ptr.vmem [resolvable:$true] %s26
      %32 = dma.hbm_to_vmem [thread:$0]  %s1, 512, %s27, [#allocation6], 128, 128, 8
    $region9: #{tabulated_linear_forward.1} parent=1 // pred_fallthru
      _
    // Predicated region
    $region10: #{tabulated_linear_forward.1} parent=1 // pred_check
      _
    $region11: #{tabulated_linear_forward.1} parent=1 // pred_check_branch
      %34 = sbr.rel (0) target = $region13
    $region12: #{tabulated_linear_forward.1} parent=1 // pred_region
      _
    $region13: #{tabulated_linear_forward.1} parent=1 // pred_fallthru
      _
    // Predicated region
    $region14: #{tabulated_linear_forward.1} parent=1 // pred_check
      _
    $region15: #{tabulated_linear_forward.1} parent=1 // pred_check_branch
      %36 = sbr.rel (0) target = $region17
    $region16: #{tabulated_linear_forward.1} parent=1 // pred_region
      %37 = dma.done [#allocation3], 128
    $region17: #{tabulated_linear_forward.1} parent=1 // pred_fallthru
      _
    // Predicated region
    $region18: #{tabulated_linear_forward.1} parent=1 // pred_check
      _
    $region19: #{tabulated_linear_forward.1} parent=1 // pred_check_branch
      %39 = sbr.rel (0) target = $region21
    $region20: #{tabulated_linear_forward.1} parent=1 // pred_region
      %40 = dma.done [#allocation6], 512
    $region21: #{tabulated_linear_forward.1} parent=1 // pred_fallthru
      _
    %v41 = vld [vmem:[#allocation2] sm:$0xff]
    %v42 = vld [vmem:[#allocation5] sm:$0xff]
    %v43 = vld [vmem:[#allocation5 + $0x8] sm:$0xff]
    %v44 = vld [vmem:[#allocation5 + $0x10] sm:$0xff]
    %v45 = vld [vmem:[#allocation5 + $0x18] sm:$0xff]
    %v46 = vld [vmem:[%s2] sm:$0x1]
    %v48 = vlaneseq
    %v49 = vshrl.u32 %v48, 7
    %v50 = vsub.s32 0, %v49
    %v51 = vrot.slane %v46, %v50
    %vm53 = vcmask 261120
    %v55 = vsel %vm53, %v41, 0
    %57 = vmatprep.subr.mxu0 0.0
    %58 = vmatpush1.msra.mxu0 %v42
    %59 = vmatprep.subr.mxu0 0.0
    %60 = vmatpush1.msra.mxu0 %v43
    %61 = vmatprep.subr.mxu0 0.0
    %62 = vmatpush1.msra.mxu0 %v44
    %63 = vmatprep.subr.mxu0 0.0
    %64 = vmatpush1.msra.mxu0 %v45
    %65 = vmatprep.subr.mxu0 0.0
    %66 = vmatpush1.msra.mxu0 0.0
    %67 = vmatprep.subr.mxu0 0.0
    %68 = vmatpush1.msra.mxu0 0.0
    %69 = vmatprep.subr.mxu0 0.0
    %70 = vmatpush1.msra.mxu0 0.0
    %71 = vmatprep.subr.mxu0 0.0
    %72 = vmatpush1.msra.mxu0 0.0
    %73 = vmatprep.subr.mxu0 0.0
    %74 = vmatpush1.msra.mxu0 0.0
    %75 = vmatprep.subr.mxu0 0.0
    %76 = vmatpush1.msra.mxu0 0.0
    %77 = vmatprep.subr.mxu0 0.0
    %78 = vmatpush1.msra.mxu0 0.0
    %79 = vmatprep.subr.mxu0 0.0
    %80 = vmatpush1.msra.mxu0 0.0
    %81 = vmatprep.subr.mxu0 0.0
    %82 = vmatpush1.msra.mxu0 0.0
    %83 = vmatprep.subr.mxu0 0.0
    %84 = vmatpush1.msra.mxu0 0.0
    %85 = vmatprep.subr.mxu0 0.0
    %86 = vmatpush1.msra.mxu0 0.0
    %87 = vmatprep.subr.mxu0 0.0
    %88 = vmatpush1.msra.mxu0 0.0
    %89 = vmatprep.subr.mxu0 0.0
    %90 = vmatpush1.msra.mxu0 0.0
    %91 = vmatprep.subr.mxu0 0.0
    %92 = vmatpush1.msra.mxu0 0.0
    %93 = vmatprep.subr.mxu0 0.0
    %94 = vmatpush1.msra.mxu0 0.0
    %95 = vmatprep.subr.mxu0 0.0
    %96 = vmatpush1.msra.mxu0 0.0
    %97 = vmatprep.subr.mxu0 0.0
    %98 = vmatpush1.msra.mxu0 0.0
    %99 = vmatprep.subr.mxu0 0.0
    %100 = vmatpush1.msra.mxu0 0.0
    %101 = vmatprep.subr.mxu0 0.0
    %102 = vmatpush1.msra.mxu0 0.0
    %103 = vmatprep.subr.mxu0 0.0
    %104 = vmatpush1.msra.mxu0 0.0
    %105 = vmatprep.subr.mxu0 0.0
    %106 = vmatpush1.msra.mxu0 0.0
    %107 = vmatprep.subr.mxu0 0.0
    %108 = vmatpush1.msra.mxu0 0.0
    %109 = vmatprep.subr.mxu0 0.0
    %110 = vmatpush1.msra.mxu0 0.0
    %111 = vmatprep.subr.mxu0 0.0
    %112 = vmatpush1.msra.mxu0 0.0
    %113 = vmatprep.subr.mxu0 0.0
    %114 = vmatpush1.msra.mxu0 0.0
    %115 = vmatprep.subr.mxu0 0.0
    %116 = vmatpush1.msra.mxu0 0.0
    %117 = vmatprep.subr.mxu0 0.0
    %118 = vmatpush1.msra.mxu0 0.0
    %119 = vmatprep.subr.mxu0 0.0
    %120 = vmatpush1.msra.mxu0 0.0
    %121 = vmatprep.mubr.f32.mxu0 0.0
    %122 = vmatmul.mubr.f32.gmra.mrb[0].mxu0 %v55
    %v123 = vpop.f32.mrb[0].mxu0
    %v124 = vadd.f32 %v51, %v123
    %v125 = vpop.f32.mrb[0].mxu0
    %126 = vdwg.mxu0
    %127 = vmax.xlane.f32.xlu0 %v124
    %v128 = vpop.xlane.xlu0 %127
    %v129 = vsub.f32 %v124, %v128
    %v130 = vmul.f32 %v129, 1.442695
    %v131 = vpow.pop %v130
    %132 = vadd.xlane.f32.xlu0 %v131
    %v133 = vpop.xlane.xlu0 %132
    %v134 = vrcp.pop %v133
    %v135 = vmul.f32 1.0, %v134
    %v136 = vmul.f32 %v131, %v135
    %vm137 = vcmask 64512
    %138 = vst.msk [vmem:[#allocation7] sm:$0xff] %vm137, %v136
    // Predicated region
    $region22: #{tabulated_linear_forward.1} parent=1 // pred_check
      _
    $region23: #{tabulated_linear_forward.1} parent=1 // pred_check_branch
      %140 = sbr.rel (0) target = $region25
    $region24: #{tabulated_linear_forward.1} parent=1 // pred_region
      %s142 = ssub.s32 128, 128
      %143 = vsyncadd [#allocation4], %s142
      %s145 = sshll.u32 [#allocation7], 4
      %s146 = int_to_ptr.vmem [resolvable:$true] %s145
      %148 = dma.vmem_to_hbm [thread:$0]  %s146, 128, %s3, [#allocation4]
    $region25: #{tabulated_linear_forward.1} parent=1 // pred_fallthru
      _
    // Predicated region
    $region26: #{tabulated_linear_forward.1} parent=1 // pred_check
      _
    $region27: #{tabulated_linear_forward.1} parent=1 // pred_check_branch
      %150 = sbr.rel (0) target = $region29
    $region28: #{tabulated_linear_forward.1} parent=1 // pred_region
      %151 = dma.done [#allocation4], 128
    $region29: #{tabulated_linear_forward.1} parent=1 // pred_fallthru
      _
    %152 = vsyncpa [#allocation3], 1
    %153 = vsyncpa [#allocation6], 1
    %154 = vsyncpa [#allocation4], 1

</llo_original>
